<compile_context>
chip_gen: v5e
topology: v5e:2x2
jax: 0.10.0
libtpu: 0.0.40
codegen_flags: <defaults>
</compile_context>

<pallas_src>
import functools

import jax
import jax.numpy as jnp
from jax import lax
from jax.experimental import pallas as pl
from jax.experimental.pallas import tpu as pltpu


# --- activations (match transformer_lens options)
_SQRT_2_OVER_PI = 0.7978845608028654

_ACTIVATIONS = {
    "relu": lambda x: jnp.maximum(x, 0.0),
    "silu": lambda x: x * jax.nn.sigmoid(x),
    "gelu": lambda x: jax.nn.gelu(x, approximate=True),
    "gelu_new": lambda x: 0.5 * x * (
        1.0 + jnp.tanh(_SQRT_2_OVER_PI * (x + 0.044715 * x * x * x))),
    "gelu_fast": lambda x: 0.5 * x * (
        1.0 + jnp.tanh(x * _SQRT_2_OVER_PI * (1.0 + 0.044715 * x * x))),
}


def _moe_expert_kernel(x_ref, we_ref, wu_ref, bi_ref, wo_ref, bo_ref,
                       o_ref, acc_ref, *,
                       gated, act_name, mlp_tile, row_tile, total_tokens):
    """One (token-tile, expert, m-tile) grid step."""
    e = pl.program_id(1)
    m = pl.program_id(2)
    last_e = pl.num_programs(1) - 1
    last_m = pl.num_programs(2) - 1

    @pl.when((e == 0) & (m == 0))
    def _init():
        acc_ref[...] = jnp.zeros_like(acc_ref)

    # Zero route weights for overhang rows of the (possibly partial) last token
    # tile, so garbage / NaN there can neither trigger nor suppress compute.
    rows = lax.broadcasted_iota(jnp.int32, we_ref.shape, 0)          # [tm, 1]
    valid = (pl.program_id(0) * row_tile + rows) < total_tokens
    we = jnp.where(valid, we_ref[...], 0.0)                          # [tm, 1] f32

    # Skip the expert body entirely if no token in this tile routed here.
    @pl.when(jnp.max(we) > 0.0)
    def _compute():
        act = _ACTIVATIONS[act_name]
        x = x_ref[...]                                               # [tm, D] bf16
        # Up / gate projection(s): one wide MXU matmul (packed [D, 2*tM] when
        # gated), f32 accumulation.
        up = jnp.dot(x, wu_ref[...], preferred_element_type=jnp.float32)
        b_in = bi_ref[...].astype(jnp.float32)                       # [1, tM]
        if gated:
            post = act(up[:, :mlp_tile]) * up[:, mlp_tile:] + b_in   # [tm, tM] f32
        else:
            post = act(up + b_in)                                    # [tm, tM] f32
        # Down projection for this m-slice, f32 accumulation.
        y = jnp.dot(post.astype(x.dtype), wo_ref[...],
                    preferred_element_type=jnp.float32)              # [tm, D] f32

        @pl.when(m == 0)
        def _bias_out():                                             # b_out once/expert
            acc_ref[...] += we * bo_ref[...].astype(jnp.float32)

        acc_ref[...] += we * y

    @pl.when((e == last_e) & (m == last_m))
    def _finalize():
        o_ref[...] = acc_ref[...].astype(o_ref.dtype)


def _default_tiling():
    """Per-generation (token tile, vmem limit) defaults."""
    try:
        vmem_cap = int(getattr(pltpu.get_tpu_info(), "vmem_capacity_bytes",
                               64 * 1024 * 1024))
    except Exception:
        vmem_cap = 64 * 1024 * 1024
    if vmem_cap >= 100 * 1024 * 1024:          # v5e / v6e: 128 MiB physical VMEM
        return 768, 96 * 1024 * 1024
    return 512, 48 * 1024 * 1024               # v7x: 64 MiB physical VMEM


def moe_forward(x, w_router, expert_params, *, experts_per_token,
                gated=True, act_fn="silu",
                block_rows=None, block_mlp=512,
                compute_dtype=jnp.bfloat16, vmem_limit_bytes=None):
    """transformer_lens MoE forward with per-token top-k routing.

    x:              [batch, pos, d_model]
    w_router:       [d_model, num_experts]
    expert_params:  expert-stacked weights:
                    W_in [E, D, M], b_in [E, M], W_out [E, M, D], b_out [E, D],
                    and (if gated) W_gate [E, D, M].
    """
    batch, pos, d_model = x.shape
    num_experts = w_router.shape[-1]
    d_mlp = expert_params["W_in"].shape[-1]
    tokens = batch * pos
    x2 = x.reshape(tokens, d_model)

    def_rows, def_vmem = _default_tiling()
    if block_rows is None:
        block_rows = def_rows
    if vmem_limit_bytes is None:
        vmem_limit_bytes = def_vmem

    tm = tokens if tokens <= block_rows else block_rows
    if tokens > block_rows and block_rows % 8:
        raise ValueError("block_rows must be a multiple of 8")
    n_row_tiles = pl.cdiv(tokens, tm)

    # --- d_mlp (M) tiling.  If tiled, tM must be lane-aligned; pad M with
    # zeros (zero columns give zero post-activation contribution through zero
    # W_out rows, so padding is exact).
    if d_mlp <= block_mlp:
        tM, m_pad = d_mlp, d_mlp
    else:
        if block_mlp % 128:
            raise ValueError("block_mlp must be a multiple of 128")
        tM = block_mlp
        m_pad = ((d_mlp + tM - 1) // tM) * tM
    n_m_tiles = m_pad // tM

    # --- routing (f32): gate logits -> top-k -> softmax -> dense [E, T, 1].
    gate_logits = jnp.dot(x2.astype(jnp.float32),
                          w_router.astype(jnp.float32))              # [T, E]
    top_w, top_i = jax.lax.top_k(gate_logits, experts_per_token)
    top_w = jax.nn.softmax(top_w, axis=-1)
    route = jnp.einsum(
        "tk,tke->te", top_w,
        jax.nn.one_hot(top_i, num_experts, dtype=jnp.float32))       # [T, E]
    route = jnp.transpose(route).reshape(num_experts, tokens, 1)     # [E, T, 1]

    # --- expert weights: bf16 MXU operands prepared once here; biases f32.
    def pad_m(a, axis):
        if m_pad == d_mlp:
            return a
        widths = [(0, 0)] * a.ndim
        widths[axis] = (0, m_pad - d_mlp)
        return jnp.pad(a, widths)

    w_in = pad_m(expert_params["W_in"], 2).astype(compute_dtype)     # [E, D, Mp]
    w_out = pad_m(expert_params["W_out"], 1).astype(compute_dtype)   # [E, Mp, D]
    b_in = pad_m(expert_params["b_in"], 1).astype(jnp.float32) \
        .reshape(num_experts, 1, m_pad)                              # [E, 1, Mp]
    b_out = expert_params["b_out"].astype(jnp.float32) \
        .reshape(num_experts, 1, d_model)                            # [E, 1, D]

    if gated:
        w_gate = pad_m(expert_params["W_gate"], 2).astype(compute_dtype)
        # Pack gate|in per m-tile: [E, D, nM, 2, tM] -> [E, D, nM*2*tM] so one
        # wide matmul produces both projections for each m-slice.
        w_up = jnp.stack(
            [w_gate.reshape(num_experts, d_model, n_m_tiles, tM),
             w_in.reshape(num_experts, d_model, n_m_tiles, tM)],
            axis=3).reshape(num_experts, d_model, n_m_tiles * 2 * tM)
        up_lanes = 2 * tM
    else:
        w_up = w_in
        up_lanes = tM

    x2c = x2.astype(compute_dtype)

    grid = (n_row_tiles, num_experts, n_m_tiles)

    in_specs = [
        pl.BlockSpec((tm, d_model), lambda i, e, m: (i, 0)),               # x tile
        pl.BlockSpec((None, tm, 1), lambda i, e, m: (e, i, 0)),            # route
        pl.BlockSpec((None, d_model, up_lanes), lambda i, e, m: (e, 0, m)),  # W_up
        pl.BlockSpec((None, 1, tM), lambda i, e, m: (e, 0, m)),            # b_in
        pl.BlockSpec((None, tM, d_model), lambda i, e, m: (e, m, 0)),      # W_out
        pl.BlockSpec((None, 1, d_model), lambda i, e, m: (e, 0, 0)),       # b_out
    ]
    inputs = [x2c, route, w_up, b_in, w_out, b_out]

    kernel = functools.partial(
        _moe_expert_kernel, gated=gated, act_name=act_fn,
        mlp_tile=tM, row_tile=tm, total_tokens=tokens)

    n_mats = 3 if gated else 2
    itemsize = jnp.dtype(compute_dtype).itemsize
    cost = pl.CostEstimate(
        flops=2 * tokens * d_model * m_pad * n_mats * num_experts,
        transcendentals=tokens * m_pad * num_experts,
        bytes_accessed=int(
            n_row_tiles * (w_up.size + w_out.size) * itemsize
            + n_row_tiles * (b_in.size + b_out.size) * 4
            + x2c.size * itemsize + route.size * 4
            + tokens * d_model * jnp.dtype(x.dtype).itemsize),
    )

    out = pl.pallas_call(
        kernel,
        out_shape=jax.ShapeDtypeStruct((tokens, d_model), x.dtype),
        grid_spec=pltpu.PrefetchScalarGridSpec(
            num_scalar_prefetch=0,
            grid=grid,
            in_specs=in_specs,
            out_specs=pl.BlockSpec((tm, d_model), lambda i, e, m: (i, 0)),
            scratch_shapes=[pltpu.VMEM((tm, d_model), jnp.float32)],
        ),
        compiler_params=pltpu.CompilerParams(
            dimension_semantics=("parallel", "arbitrary", "arbitrary"),
            vmem_limit_bytes=vmem_limit_bytes,
        ),
        cost_estimate=cost,
    )(*inputs)

    return out.reshape(batch, pos, d_model)


def _moe_ref(x, w_router, expert_params, *, experts_per_token, gated, act_fn,
             compute_dtype=jnp.float32):
    """Pure-JAX reference (same per-token routing semantics)."""
    batch, pos, d_model = x.shape
    xf = x.reshape(batch * pos, d_model).astype(jnp.float32)
    num_experts = w_router.shape[-1]
    logits = jnp.dot(xf, w_router.astype(jnp.float32))
    top_w, top_i = jax.lax.top_k(logits, experts_per_token)
    top_w = jax.nn.softmax(top_w, axis=-1)
    route = jnp.einsum("tk,tke->te", top_w,
                       jax.nn.one_hot(top_i, num_experts, dtype=jnp.float32))
    act = _ACTIVATIONS[act_fn]
    xc = xf.astype(compute_dtype)
    out = jnp.zeros_like(xf)
    for e in range(num_experts):
        w_in = expert_params["W_in"][e].astype(compute_dtype)
        b_in = expert_params["b_in"][e].astype(jnp.float32)
        w_out = expert_params["W_out"][e].astype(compute_dtype)
        b_out = expert_params["b_out"][e].astype(jnp.float32)
        if gated:
            w_g = expert_params["W_gate"][e].astype(compute_dtype)
            pre = jnp.dot(xc, w_g, preferred_element_type=jnp.float32)
            pre_lin = jnp.dot(xc, w_in, preferred_element_type=jnp.float32)
            post = act(pre) * pre_lin + b_in
        else:
            post = act(jnp.dot(xc, w_in, preferred_element_type=jnp.float32) + b_in)
        y = jnp.dot(post.astype(compute_dtype), w_out,
                    preferred_element_type=jnp.float32) + b_out
        out = out + route[:, e:e + 1] * y
    return out.reshape(batch, pos, d_model).astype(x.dtype)


def _make_params(key, d_model, d_mlp, num_experts):
    ks = jax.random.split(key, 5)
    s_in, s_mid = d_model ** -0.5, d_mlp ** -0.5
    return {
        "W_gate": jax.random.normal(ks[0], (num_experts, d_model, d_mlp),
                                    jnp.float32) * s_in,
        "W_in": jax.random.normal(ks[1], (num_experts, d_model, d_mlp),
                                  jnp.float32) * s_in,
        "b_in": jax.random.normal(ks[2], (num_experts, d_mlp), jnp.float32) * 0.02,
        "W_out": jax.random.normal(ks[3], (num_experts, d_mlp, d_model),
                                   jnp.float32) * s_mid,
        "b_out": jax.random.normal(ks[4], (num_experts, d_model), jnp.float32) * 0.02,
    }


def _check(name, out, x, w_router, params, *, k, gated, act_fn):
    ref_bf = _moe_ref(x, w_router, params, experts_per_token=k, gated=gated,
                      act_fn=act_fn, compute_dtype=jnp.bfloat16)
    ref_f32 = _moe_ref(x, w_router, params, experts_per_token=k, gated=gated,
                       act_fn=act_fn, compute_dtype=jnp.float32)
    assert out.shape == x.shape and out.dtype == x.dtype, name
    err_bf = float(jnp.max(jnp.abs(out - ref_bf)))
    rel_f32 = float(jnp.linalg.norm(out - ref_f32) / (jnp.linalg.norm(ref_f32) + 1e-30))
    assert err_bf < 5e-3, (name, err_bf)      # vs identically-cast reference
    assert rel_f32 < 2e-2, (name, rel_f32)    # sanity vs full-f32 reference


if __name__ == "__main__":
    key = jax.random.PRNGKey(0)
    k0, k1, k2, k3, k4, k5 = jax.random.split(key, 6)

    # --- Test 1: gated experts (silu), single m-tile / token tile -----------
    batch, pos, d_model, d_mlp, E, K = 2, 8, 32, 64, 4, 2
    x = jax.random.normal(k0, (batch, pos, d_model), jnp.float32)
    w_router = jax.random.normal(k1, (d_model, E), jnp.float32) * d_model ** -0.5
    params = _make_params(k2, d_model, d_mlp, E)

    out = jax.block_until_ready(
        moe_forward(x, w_router, params, experts_per_token=K,
                    gated=True, act_fn="silu"))
    _check("gated_silu", out, x, w_router, params, k=K, gated=True, act_fn="silu")

    # --- Test 2: plain MLP experts (gelu_new) --------------------------------
    out2 = jax.block_until_ready(
        moe_forward(x, w_router, params, experts_per_token=K,
                    gated=False, act_fn="gelu_new"))
    _check("mlp_gelu_new", out2, x, w_router, params, k=K, gated=False,
           act_fn="gelu_new")

    # --- Test 3: exercises d_mlp tiling + zero padding + masked token tail ---
    batch, pos, d_model, d_mlp, E, K = 2, 10, 128, 192, 4, 2
    x3 = jax.random.normal(k3, (batch, pos, d_model), jnp.float32)
    w_router3 = jax.random.normal(k4, (d_model, E), jnp.float32) * d_model ** -0.5
    params3 = _make_params(k5, d_model, d_mlp, E)

    out3 = jax.block_until_ready(
        moe_forward(x3, w_router3, params3, experts_per_token=K,
                    gated=True, act_fn="silu", block_rows=16, block_mlp=128))
    _check("gated_tiled_tail", out3, x3, w_router3, params3, k=K, gated=True,
           act_fn="silu")

    print("KERNEL_OK")
</pallas_src>

<mosaic_0001>
module attributes {stable_mosaic.version = 11 : i64} {
  func.func @_moe_expert_kernel(%arg0: i32, %arg1: i32, %arg2: i32, %arg3: memref<16x32xbf16, #tpu.memory_space<vmem>>, %arg4: memref<1x16x1xf32, #tpu.memory_space<vmem>>, %arg5: memref<1x32x128xbf16, #tpu.memory_space<vmem>>, %arg6: memref<1x1x64xf32, #tpu.memory_space<vmem>>, %arg7: memref<1x64x32xbf16, #tpu.memory_space<vmem>>, %arg8: memref<1x1x32xf32, #tpu.memory_space<vmem>>, %arg9: memref<16x32xf32, #tpu.memory_space<vmem>>, %arg10: memref<16x32xf32, #tpu.memory_space<vmem>>) attributes {dimension_semantics = [#tpu.dimension_semantics<parallel>, #tpu.dimension_semantics<arbitrary>, #tpu.dimension_semantics<arbitrary>], iteration_bounds = array<i64: 1, 4, 1>, scalar_prefetch = 0 : i64, scratch_operands = 1 : i64, tpu.core_type = #tpu.core_type<tc>, window_params = [{transform_indices = @transform_0, window_bounds = array<i64: 16, 32>}, {transform_indices = @transform_1, window_bounds = array<i64: 1, 16, 1>}, {transform_indices = @transform_2, window_bounds = array<i64: 1, 32, 128>}, {transform_indices = @transform_3, window_bounds = array<i64: 1, 1, 64>}, {transform_indices = @transform_4, window_bounds = array<i64: 1, 64, 32>}, {transform_indices = @transform_5, window_bounds = array<i64: 1, 1, 32>}, {transform_indices = @transform_6, window_bounds = array<i64: 16, 32>}]} {
    %c0_i32 = arith.constant 0 : i32
    %0 = arith.cmpi eq, %arg1, %c0_i32 : i32
    %c0_i32_0 = arith.constant 0 : i32
    %1 = arith.cmpi eq, %arg2, %c0_i32_0 : i32
    %2 = arith.andi %0, %1 : i1
    %3 = arith.extui %2 : i1 to i32
    %c0_i32_1 = arith.constant 0 : i32
    %4 = arith.cmpi ne, %3, %c0_i32_1 : i32
    scf.if %4 {
      %cst_10 = arith.constant 0.000000e+00 : f32
      %27 = vector.broadcast %cst_10 : f32 to vector<16x32xf32>
      %c0_11 = arith.constant 0 : index
      %c0_12 = arith.constant 0 : index
      %28 = vector.load %arg10[%c0_11, %c0_12] : memref<16x32xf32, #tpu.memory_space<vmem>>, vector<16x32xf32>
      tpu.vector_store %arg10[%c0_11, %c0_12], %27 {strides = array<i32>} : memref<16x32xf32, #tpu.memory_space<vmem>>, vector<16x32xf32>,
    } else {
    }
    %5 = tpu.iota {dimensions = array<i32: 0>} : vector<16x1xi32>
    %c16_i32 = arith.constant 16 : i32
    %6 = arith.muli %arg0, %c16_i32 : i32
    %7 = vector.broadcast %6 : i32 to vector<16x1xi32>
    %8 = arith.addi %7, %5 : vector<16x1xi32>
    %c16_i32_2 = arith.constant 16 : i32
    %9 = vector.broadcast %c16_i32_2 : i32 to vector<16x1xi32>
    %10 = arith.cmpi slt, %8, %9 : vector<16x1xi32>
    %c0 = arith.constant 0 : index
    %c0_3 = arith.constant 0 : index
    %c0_4 = arith.constant 0 : index
    %11 = vector.load %arg4[%c0, %c0_3, %c0_4] : memref<1x16x1xf32, #tpu.memory_space<vmem>>, vector<1x16x1xf32>
    %12 = vector.shape_cast %11 : vector<1x16x1xf32> to vector<16x1xf32>
    %cst = arith.constant 0.000000e+00 : f32
    %13 = vector.broadcast %cst : f32 to vector<16x1xf32>
    %14 = arith.select %10, %12, %13 : vector<16x1xi1>, vector<16x1xf32>
    %15 = vector.shape_cast %14 : vector<16x1xf32> to vector<1x16x1xf32>
    %cst_5 = arith.constant dense<0xFF800000> : vector<1xf32>
    %16 = vector.multi_reduction <maximumf>, %15, %cst_5 [1, 2] : vector<1x16x1xf32> to vector<1xf32>
    %17 = vector.shape_cast %16 : vector<1xf32> to vector<1x1x1xf32>
    %18 = vector.extract %17[0, 0, 0] : f32 from vector<1x1x1xf32>
    %cst_6 = arith.constant 0.000000e+00 : f32
    %19 = arith.cmpf ogt, %18, %cst_6 : f32
    %20 = arith.extui %19 : i1 to i32
    %c0_i32_7 = arith.constant 0 : i32
    %21 = arith.cmpi ne, %20, %c0_i32_7 : i32
    scf.if %21 {
      %c0_10 = arith.constant 0 : index
      %c0_11 = arith.constant 0 : index
      %27 = vector.load %arg3[%c0_10, %c0_11] : memref<16x32xbf16, #tpu.memory_space<vmem>>, vector<16x32xbf16>
      %c0_12 = arith.constant 0 : index
      %c0_13 = arith.constant 0 : index
      %c0_14 = arith.constant 0 : index
      %28 = vector.load %arg5[%c0_12, %c0_13, %c0_14] : memref<1x32x128xbf16, #tpu.memory_space<vmem>>, vector<1x32x128xbf16>
      %29 = vector.shape_cast %28 : vector<1x32x128xbf16> to vector<32x128xbf16>
      %cst_15 = arith.constant dense<0.000000e+00> : vector<16x128xf32>
      %30 = tpu.matmul %27, %29, %cst_15 {dimension_numbers = #tpu.dot_dimension_numbers<[1], [0], [0], [1], [0, 0, 1, 1], [], []>} : vector<16x32xbf16>, vector<32x128xbf16>, vector<16x128xf32> -> vector<16x128xf32>
      %c0_16 = arith.constant 0 : index
      %c0_17 = arith.constant 0 : index
      %c0_18 = arith.constant 0 : index
      %31 = vector.load %arg6[%c0_16, %c0_17, %c0_18] : memref<1x1x64xf32, #tpu.memory_space<vmem>>, vector<1x1x64xf32>
      %32 = vector.shape_cast %31 : vector<1x1x64xf32> to vector<1x64xf32>
      %33 = vector.extract_strided_slice %30 {offsets = [0, 0], sizes = [16, 64], strides = [1, 1]} : vector<16x128xf32> to vector<16x64xf32>
      %34 = arith.negf %33 : vector<16x64xf32>
      %35 = math.exp %34 : vector<16x64xf32>
      %cst_19 = arith.constant 1.000000e+00 : f32
      %36 = vector.broadcast %cst_19 : f32 to vector<16x64xf32>
      %37 = arith.addf %36, %35 : vector<16x64xf32>
      %38 = arith.divf %36, %37 : vector<16x64xf32>
      %39 = arith.mulf %33, %38 : vector<16x64xf32>
      %40 = vector.extract_strided_slice %30 {offsets = [0, 64], sizes = [16, 64], strides = [1, 1]} : vector<16x128xf32> to vector<16x64xf32>
      %41 = arith.mulf %39, %40 : vector<16x64xf32>
      %42 = vector.broadcast %32 : vector<1x64xf32> to vector<16x64xf32>
      %43 = arith.addf %41, %42 : vector<16x64xf32>
      %44 = arith.truncf %43 : vector<16x64xf32> to vector<16x64xbf16>
      %c0_20 = arith.constant 0 : index
      %c0_21 = arith.constant 0 : index
      %c0_22 = arith.constant 0 : index
      %45 = vector.load %arg7[%c0_20, %c0_21, %c0_22] : memref<1x64x32xbf16, #tpu.memory_space<vmem>>, vector<1x64x32xbf16>
      %46 = vector.shape_cast %45 : vector<1x64x32xbf16> to vector<64x32xbf16>
      %cst_23 = arith.constant dense<0.000000e+00> : vector<16x32xf32>
      %47 = tpu.matmul %44, %46, %cst_23 {dimension_numbers = #tpu.dot_dimension_numbers<[1], [0], [0], [1], [0, 0, 1, 1], [], []>} : vector<16x64xbf16>, vector<64x32xbf16>, vector<16x32xf32> -> vector<16x32xf32>
      %c0_i32_24 = arith.constant 0 : i32
      %48 = arith.cmpi eq, %arg2, %c0_i32_24 : i32
      %49 = arith.extui %48 : i1 to i32
      %c0_i32_25 = arith.constant 0 : i32
      %50 = arith.cmpi ne, %49, %c0_i32_25 : i32
      scf.if %50 {
        %c0_30 = arith.constant 0 : index
        %c0_31 = arith.constant 0 : index
        %56 = vector.load %arg10[%c0_30, %c0_31] : memref<16x32xf32, #tpu.memory_space<vmem>>, vector<16x32xf32>
        %c0_32 = arith.constant 0 : index
        %c0_33 = arith.constant 0 : index
        %c0_34 = arith.constant 0 : index
        %57 = vector.load %arg8[%c0_32, %c0_33, %c0_34] : memref<1x1x32xf32, #tpu.memory_space<vmem>>, vector<1x1x32xf32>
        %58 = vector.shape_cast %57 : vector<1x1x32xf32> to vector<1x32xf32>
        %59 = vector.broadcast %14 : vector<16x1xf32> to vector<16x32xf32>
        %60 = vector.broadcast %58 : vector<1x32xf32> to vector<16x32xf32>
        %61 = arith.mulf %59, %60 : vector<16x32xf32>
        %62 = arith.addf %56, %61 : vector<16x32xf32>
        %c0_35 = arith.constant 0 : index
        %c0_36 = arith.constant 0 : index
        %63 = vector.load %arg10[%c0_35, %c0_36] : memref<16x32xf32, #tpu.memory_space<vmem>>, vector<16x32xf32>
        tpu.vector_store %arg10[%c0_35, %c0_36], %62 {strides = array<i32>} : memref<16x32xf32, #tpu.memory_space<vmem>>, vector<16x32xf32>,
      } else {
      }
      %c0_26 = arith.constant 0 : index
      %c0_27 = arith.constant 0 : index
      %51 = vector.load %arg10[%c0_26, %c0_27] : memref<16x32xf32, #tpu.memory_space<vmem>>, vector<16x32xf32>
      %52 = vector.broadcast %14 : vector<16x1xf32> to vector<16x32xf32>
      %53 = arith.mulf %52, %47 : vector<16x32xf32>
      %54 = arith.addf %51, %53 : vector<16x32xf32>
      %c0_28 = arith.constant 0 : index
      %c0_29 = arith.constant 0 : index
      %55 = vector.load %arg10[%c0_28, %c0_29] : memref<16x32xf32, #tpu.memory_space<vmem>>, vector<16x32xf32>
      tpu.vector_store %arg10[%c0_28, %c0_29], %54 {strides = array<i32>} : memref<16x32xf32, #tpu.memory_space<vmem>>, vector<16x32xf32>,
    } else {
    }
    %c3_i32 = arith.constant 3 : i32
    %22 = arith.cmpi eq, %arg1, %c3_i32 : i32
    %c0_i32_8 = arith.constant 0 : i32
    %23 = arith.cmpi eq, %arg2, %c0_i32_8 : i32
    %24 = arith.andi %22, %23 : i1
    %25 = arith.extui %24 : i1 to i32
    %c0_i32_9 = arith.constant 0 : i32
    %26 = arith.cmpi ne, %25, %c0_i32_9 : i32
    scf.if %26 {
      %c0_10 = arith.constant 0 : index
      %c0_11 = arith.constant 0 : index
      %27 = vector.load %arg10[%c0_10, %c0_11] : memref<16x32xf32, #tpu.memory_space<vmem>>, vector<16x32xf32>
      %c0_12 = arith.constant 0 : index
      %c0_13 = arith.constant 0 : index
      %28 = vector.load %arg9[%c0_12, %c0_13] : memref<16x32xf32, #tpu.memory_space<vmem>>, vector<16x32xf32>
      tpu.vector_store %arg9[%c0_12, %c0_13], %27 {strides = array<i32>} : memref<16x32xf32, #tpu.memory_space<vmem>>, vector<16x32xf32>,
    } else {
    }
    return
  }
  func.func @transform_0(%arg0: i32, %arg1: i32, %arg2: i32) -> (i32, i32) {
    %c0_i32 = arith.constant 0 : i32
    %c0_i32_0 = arith.constant 0 : i32
    return %arg0, %c0_i32 : i32, i32
  }
  func.func @transform_1(%arg0: i32, %arg1: i32, %arg2: i32) -> (i32, i32, i32) {
    %c0_i32 = arith.constant 0 : i32
    %c0_i32_0 = arith.constant 0 : i32
    return %arg1, %arg0, %c0_i32 : i32, i32, i32
  }
  func.func @transform_2(%arg0: i32, %arg1: i32, %arg2: i32) -> (i32, i32, i32) {
    %c0_i32 = arith.constant 0 : i32
    %c0_i32_0 = arith.constant 0 : i32
    return %arg1, %c0_i32, %arg2 : i32, i32, i32
  }
  func.func @transform_3(%arg0: i32, %arg1: i32, %arg2: i32) -> (i32, i32, i32) {
    %c0_i32 = arith.constant 0 : i32
    %c0_i32_0 = arith.constant 0 : i32
    return %arg1, %c0_i32, %arg2 : i32, i32, i32
  }
  func.func @transform_4(%arg0: i32, %arg1: i32, %arg2: i32) -> (i32, i32, i32) {
    %c0_i32 = arith.constant 0 : i32
    %c0_i32_0 = arith.constant 0 : i32
    return %arg1, %arg2, %c0_i32 : i32, i32, i32
  }
  func.func @transform_5(%arg0: i32, %arg1: i32, %arg2: i32) -> (i32, i32, i32) {
    %c0_i32 = arith.constant 0 : i32
    %c0_i32_0 = arith.constant 0 : i32
    %c0_i32_1 = arith.constant 0 : i32
    return %arg1, %c0_i32, %c0_i32_0 : i32, i32, i32
  }
  func.func @transform_6(%arg0: i32, %arg1: i32, %arg2: i32) -> (i32, i32) {
    %c0_i32 = arith.constant 0 : i32
    %c0_i32_0 = arith.constant 0 : i32
    return %arg0, %c0_i32 : i32, i32
  }
}

</mosaic_0001>

<llo_original>
// kernel: tpu_custom_call.1
$region0: #{tpu_custom_call.1}
  #allocation0 [shape = 'u32[]', space=smem, size = 0x4, offset = 0x4, fixed_abs, tag = 'smem constant byte address 0x4 - core index']
  #allocation1 [shape = 'u32[72,128]{1,0:T(1,128)}', space=vmem, size = 0x9000, scoped, tag = 'internal scratch']
  #allocation2 [shape = 'f32[16,32]{1,0:T(8,128)}', space=vmem, size = 0x2000, scoped, tag = 'scratch operand']
  %s0 = inlined_call_operand.vmem [shape: bf16[16,32], index: 0, kind: input, shape index: {}]
  %s1 = inlined_call_operand.vmem [shape: f32[4,16,1], index: 1, kind: input, shape index: {}]
  %s2 = inlined_call_operand.vmem [shape: bf16[4,32,128], index: 2, kind: input, shape index: {}]
  %s3 = inlined_call_operand.vmem [shape: f32[4,1,64], index: 3, kind: input, shape index: {}]
  %s4 = inlined_call_operand.vmem [shape: bf16[4,64,32], index: 4, kind: input, shape index: {}]
  %s5 = inlined_call_operand.vmem [shape: f32[4,1,32], index: 5, kind: input, shape index: {}]
  %s6 = inlined_call_operand.hbm [shape: f32[16,32], index: 6, kind: output, shape index: {}]
  %s7 = sld [smem:[#allocation0]]
  $region73: #{tpu_custom_call.1} parent=0
    _
  %s9 = ssub.s32 1, %s7
  %s10 = scalar_select 0, %s9, %s7
  $region1: #{tpu_custom_call.1} parent=0
    #allocation3 [shape = 'u8[8192]{0}', space=vmem, size = 0x2000, scoped, tag = 'output window, operand 0, single buffered']
    #allocation4 [shape = 's32[2]{0}', space=sflag, size = 0x8, scoped, tag = 'scoped memory for tpu_custom_call.1']
    %11 = vsyncpa [#allocation4], 0
    loop: start=0, step=1, limit=6
    $region2: #{tpu_custom_call.1} parent=1 // loop_pre_header
      _
    $region3: #{tpu_custom_call.1} parent=1 // loop_header
      %s13 = sphi 0, %s17
      %p14 = scmp.ge.s32.totalorder %s13, 6
      %s20 = sphi 0, %s39
      %s21 = sphi 0, %s35
      %s22 = sphi 0, %s31
      %s23 = sphi 0, %s20
      %s24 = sphi 0, %s21
      %s25 = sphi 0, %s22
      %s26 = sphi 0, %s23
      %s27 = sphi 0, %s24
      %s28 = sphi 0, %s25
      %s42 = sphi 0, %s44
      %s45 = sphi 0, %s42
      %s46 = sphi 0, %s45
      %s62 = sphi 0, %s46
      %s70 = sphi 0, %s72
      %s73 = sphi 0, %s70
      %s74 = sphi 0, %s73
      %s90 = sphi 0, %s74
      %s98 = sphi 0, %s100
      %s101 = sphi 0, %s98
      %s102 = sphi 0, %s101
      %s118 = sphi 0, %s102
      %s126 = sphi 0, %s128
      %s129 = sphi 0, %s126
      %s130 = sphi 0, %s129
      %s146 = sphi 0, %s130
      %s154 = sphi 0, %s156
      %s157 = sphi 0, %s154
      %s158 = sphi 0, %s157
      %s174 = sphi 0, %s158
      %s180 = sphi 0, %s182
      %s183 = sphi 0, %s180
      %s184 = sphi 0, %s183
      %s200 = sphi 0, %s184
      %s206 = sphi 0, %s208
      %s209 = sphi 0, %s206
      %s210 = sphi 0, %s209
      %s226 = sphi 0, %s210
    $region4: #{tpu_custom_call.1} parent=1 // loop_header_branch
      %16 = sbr.rel (%p14) target = $region8
    $region5: #{tpu_custom_call.1} parent=1 // loop_body
      %s18 = ssub.s32 %s13, 1
      %s19 = ssub.s32 %s13, 2
      %s29 = sadd.s32 1, %s22
      %p30 = scmp.ge.s32.totalorder %s29, 1
      %s31 = scalar_select %p30, 0, %s29
      %s32 = sadd.s32 1, %s21
      %s33 = scalar_select %p30, %s32, %s21
      %p34 = scmp.ge.s32.totalorder %s33, 4
      %s35 = scalar_select %p34, 0, %s33
      %s36 = sadd.s32 1, %s20
      %s37 = scalar_select %p34, %s36, %s20
      %p38 = scmp.ge.s32.totalorder %s37, 1
      %s39 = scalar_select %p38, 0, %s37
      %s40 = ssub.s32 %s20, %s39
      %p41 = scmp.eq.s32.totalorder %s40, 0
      %s43 = sadd.s32 %s42, 1
      %s44 = scalar_select %p41, %s42, %s43
      %p47 = pneg %p41
      %p48 = scmp.eq.s32.totalorder %s13, 3
      %p49 = por %p47, %p48
      %p50 = scmp.ne.s32.totalorder %s42, %s45
      %p51 = scmp.eq.s32.totalorder %s13, 0
      %p52 = por %p50, %p51
      %p53 = scmp.ne.s32.totalorder %s42, %s45
      %p54 = scmp.eq.s32.totalorder %s18, 3
      %p55 = por %p53, %p54
      %p56 = scmp.ne.s32.totalorder %s45, %s46
      %p57 = scmp.eq.s32.totalorder %s18, 0
      %p58 = por %p56, %p57
      %p59 = scmp.ne.s32.totalorder %s45, %s46
      %p60 = scmp.eq.s32.totalorder %s19, 3
      %p61 = por %p59, %p60
      %p63 = scmp.ne.s32.totalorder %s46, %s62
      %p64 = scmp.eq.s32.totalorder %s19, 0
      %p65 = por %p63, %p64
      %s66 = ssub.s32 %s21, %s35
      %s67 = ssub.s32 %s20, %s39
      %s68 = sor.u32 %s66, %s67
      %p69 = scmp.eq.s32.totalorder %s68, 0
      %s71 = sadd.s32 %s70, 1
      %s72 = scalar_select %p69, %s70, %s71
      %p75 = pneg %p69
      %p76 = scmp.eq.s32.totalorder %s13, 3
      %p77 = por %p75, %p76
      %p78 = scmp.ne.s32.totalorder %s70, %s73
      %p79 = scmp.eq.s32.totalorder %s13, 0
      %p80 = por %p78, %p79
      %p81 = scmp.ne.s32.totalorder %s70, %s73
      %p82 = scmp.eq.s32.totalorder %s18, 3
      %p83 = por %p81, %p82
      %p84 = scmp.ne.s32.totalorder %s73, %s74
      %p85 = scmp.eq.s32.totalorder %s18, 0
      %p86 = por %p84, %p85
      %p87 = scmp.ne.s32.totalorder %s73, %s74
      %p88 = scmp.eq.s32.totalorder %s19, 3
      %p89 = por %p87, %p88
      %p91 = scmp.ne.s32.totalorder %s74, %s90
      %p92 = scmp.eq.s32.totalorder %s19, 0
      %p93 = por %p91, %p92
      %s94 = ssub.s32 %s21, %s35
      %s95 = ssub.s32 %s22, %s31
      %s96 = sor.u32 %s94, %s95
      %p97 = scmp.eq.s32.totalorder %s96, 0
      %s99 = sadd.s32 %s98, 1
      %s100 = scalar_select %p97, %s98, %s99
      %p103 = pneg %p97
      %p104 = scmp.eq.s32.totalorder %s13, 3
      %p105 = por %p103, %p104
      %p106 = scmp.ne.s32.totalorder %s98, %s101
      %p107 = scmp.eq.s32.totalorder %s13, 0
      %p108 = por %p106, %p107
      %p109 = scmp.ne.s32.totalorder %s98, %s101
      %p110 = scmp.eq.s32.totalorder %s18, 3
      %p111 = por %p109, %p110
      %p112 = scmp.ne.s32.totalorder %s101, %s102
      %p113 = scmp.eq.s32.totalorder %s18, 0
      %p114 = por %p112, %p113
      %p115 = scmp.ne.s32.totalorder %s101, %s102
      %p116 = scmp.eq.s32.totalorder %s19, 3
      %p117 = por %p115, %p116
      %p119 = scmp.ne.s32.totalorder %s102, %s118
      %p120 = scmp.eq.s32.totalorder %s19, 0
      %p121 = por %p119, %p120
      %s122 = ssub.s32 %s21, %s35
      %s123 = ssub.s32 %s22, %s31
      %s124 = sor.u32 %s122, %s123
      %p125 = scmp.eq.s32.totalorder %s124, 0
      %s127 = sadd.s32 %s126, 1
      %s128 = scalar_select %p125, %s126, %s127
      %p131 = pneg %p125
      %p132 = scmp.eq.s32.totalorder %s13, 3
      %p133 = por %p131, %p132
      %p134 = scmp.ne.s32.totalorder %s126, %s129
      %p135 = scmp.eq.s32.totalorder %s13, 0
      %p136 = por %p134, %p135
      %p137 = scmp.ne.s32.totalorder %s126, %s129
      %p138 = scmp.eq.s32.totalorder %s18, 3
      %p139 = por %p137, %p138
      %p140 = scmp.ne.s32.totalorder %s129, %s130
      %p141 = scmp.eq.s32.totalorder %s18, 0
      %p142 = por %p140, %p141
      %p143 = scmp.ne.s32.totalorder %s129, %s130
      %p144 = scmp.eq.s32.totalorder %s19, 3
      %p145 = por %p143, %p144
      %p147 = scmp.ne.s32.totalorder %s130, %s146
      %p148 = scmp.eq.s32.totalorder %s19, 0
      %p149 = por %p147, %p148
      %s150 = ssub.s32 %s21, %s35
      %s151 = ssub.s32 %s22, %s31
      %s152 = sor.u32 %s150, %s151
      %p153 = scmp.eq.s32.totalorder %s152, 0
      %s155 = sadd.s32 %s154, 1
      %s156 = scalar_select %p153, %s154, %s155
      %p159 = pneg %p153
      %p160 = scmp.eq.s32.totalorder %s13, 3
      %p161 = por %p159, %p160
      %p162 = scmp.ne.s32.totalorder %s154, %s157
      %p163 = scmp.eq.s32.totalorder %s13, 0
      %p164 = por %p162, %p163
      %p165 = scmp.ne.s32.totalorder %s154, %s157
      %p166 = scmp.eq.s32.totalorder %s18, 3
      %p167 = por %p165, %p166
      %p168 = scmp.ne.s32.totalorder %s157, %s158
      %p169 = scmp.eq.s32.totalorder %s18, 0
      %p170 = por %p168, %p169
      %p171 = scmp.ne.s32.totalorder %s157, %s158
      %p172 = scmp.eq.s32.totalorder %s19, 3
      %p173 = por %p171, %p172
      %p175 = scmp.ne.s32.totalorder %s158, %s174
      %p176 = scmp.eq.s32.totalorder %s19, 0
      %p177 = por %p175, %p176
      %s178 = ssub.s32 %s21, %s35
      %p179 = scmp.eq.s32.totalorder %s178, 0
      %s181 = sadd.s32 %s180, 1
      %s182 = scalar_select %p179, %s180, %s181
      %p185 = pneg %p179
      %p186 = scmp.eq.s32.totalorder %s13, 3
      %p187 = por %p185, %p186
      %p188 = scmp.ne.s32.totalorder %s180, %s183
      %p189 = scmp.eq.s32.totalorder %s13, 0
      %p190 = por %p188, %p189
      %p191 = scmp.ne.s32.totalorder %s180, %s183
      %p192 = scmp.eq.s32.totalorder %s18, 3
      %p193 = por %p191, %p192
      %p194 = scmp.ne.s32.totalorder %s183, %s184
      %p195 = scmp.eq.s32.totalorder %s18, 0
      %p196 = por %p194, %p195
      %p197 = scmp.ne.s32.totalorder %s183, %s184
      %p198 = scmp.eq.s32.totalorder %s19, 3
      %p199 = por %p197, %p198
      %p201 = scmp.ne.s32.totalorder %s184, %s200
      %p202 = scmp.eq.s32.totalorder %s19, 0
      %p203 = por %p201, %p202
      %s204 = ssub.s32 %s20, %s39
      %p205 = scmp.eq.s32.totalorder %s204, 0
      %s207 = sadd.s32 %s206, 1
      %s208 = scalar_select %p205, %s206, %s207
      %p211 = pneg %p205
      %p212 = scmp.eq.s32.totalorder %s13, 3
      %p213 = por %p211, %p212
      %p214 = scmp.ne.s32.totalorder %s206, %s209
      %p215 = scmp.eq.s32.totalorder %s13, 0
      %p216 = por %p214, %p215
      %p217 = scmp.ne.s32.totalorder %s206, %s209
      %p218 = scmp.eq.s32.totalorder %s18, 3
      %p219 = por %p217, %p218
      %p220 = scmp.ne.s32.totalorder %s209, %s210
      %p221 = scmp.eq.s32.totalorder %s18, 0
      %p222 = por %p220, %p221
      %p223 = scmp.ne.s32.totalorder %s209, %s210
      %p224 = scmp.eq.s32.totalorder %s19, 3
      %p225 = por %p223, %p224
      %p227 = scmp.ne.s32.totalorder %s210, %s226
      %p228 = scmp.eq.s32.totalorder %s19, 0
      %p229 = por %p227, %p228
      %p230 = scmp.le.s32.totalorder 1, %s13
      %p231 = scmp.lt.s32.totalorder %s13, 5
      %p232 = pnand %p230, %p231
      %p233 = pneg %p232
      // Predicated region
      $region9: #{tpu_custom_call.1} parent=5 // pred_check
        _
      $region10: #{tpu_custom_call.1} parent=5 // pred_check_branch
        %235 = sbr.rel (%p232) target = $region12
      $region11: #{tpu_custom_call.1} parent=5 // pred_region
        %s236 = ssub.s32 %s13, 1
        // Predicated region
        $region13: #{tpu_custom_call.1} parent=11 // pred_check
          %p237 = pneg %p58
        $region14: #{tpu_custom_call.1} parent=11 // pred_check_branch
          %239 = sbr.rel (%p237) target = $region16
        $region15: #{tpu_custom_call.1} parent=11 // pred_region
          %s240 = smul.u32 2, %s23
          %p241 = scmp.lt.s32.totalorder %s240, 1
          %s242 = scalar_select %p241, %s240, 1
          %s243 = smul.addr %s242, 4
          %s244 = scalar_lea.vmem %s0, %s243
          %s245 = smul.u32 2, %s23
        $region16: #{tpu_custom_call.1} parent=11 // pred_fallthru
          _
      $region12: #{tpu_custom_call.1} parent=5 // pred_fallthru
        _
      %p246 = scmp.lt.s32.totalorder %s13, 4
      // Predicated region
      $region17: #{tpu_custom_call.1} parent=5 // pred_check
        %p247 = pneg %p246
      $region18: #{tpu_custom_call.1} parent=5 // pred_check_branch
        %249 = sbr.rel (%p247) target = $region20
      $region19: #{tpu_custom_call.1} parent=5 // pred_region
        // Predicated region
        $region21: #{tpu_custom_call.1} parent=19 // pred_check
          %p250 = pneg %p80
        $region22: #{tpu_custom_call.1} parent=19 // pred_check_branch
          %252 = sbr.rel (%p250) target = $region24
        $region23: #{tpu_custom_call.1} parent=19 // pred_region
          %s253 = smul.u32 2, %s20
          %p254 = scmp.lt.s32.totalorder %s21, 3
          %s255 = scalar_select %p254, %s21, 3
          %p256 = scmp.lt.s32.totalorder %s253, 1
          %s257 = scalar_select %p256, %s253, 1
          %s258 = smul.addr %s255, 2
          %s259 = sadd.s32 %s257, %s258
          %s260 = smul.addr %s259, 8
          %s261 = scalar_lea.vmem %s1, %s260
          %s262 = smul.u32 2, %s20
        $region24: #{tpu_custom_call.1} parent=19 // pred_fallthru
          _
        // Predicated region
        $region25: #{tpu_custom_call.1} parent=19 // pred_check
          %p263 = pneg %p108
        $region26: #{tpu_custom_call.1} parent=19 // pred_check_branch
          %265 = sbr.rel (%p263) target = $region28
        $region27: #{tpu_custom_call.1} parent=19 // pred_region
          %p266 = scmp.lt.s32.totalorder %s21, 3
          %s267 = scalar_select %p266, %s21, 3
          %p268 = scmp.lt.s32.totalorder %s22, 0
          %s269 = scalar_select %p268, %s22, 0
          %s270 = smul.addr %s267, 4
          %s271 = sadd.s32 %s269, %s270
          %s272 = smul.addr %s271, 4
          %s273 = scalar_lea.vmem %s2, %s272
        $region28: #{tpu_custom_call.1} parent=19 // pred_fallthru
          _
        // Predicated region
        $region29: #{tpu_custom_call.1} parent=19 // pred_check
          %p274 = pneg %p136
        $region30: #{tpu_custom_call.1} parent=19 // pred_check_branch
          %276 = sbr.rel (%p274) target = $region32
        $region31: #{tpu_custom_call.1} parent=19 // pred_region
          %p277 = scmp.lt.s32.totalorder %s21, 3
          %s278 = scalar_select %p277, %s21, 3
          %p279 = scmp.lt.s32.totalorder %s22, 0
          %s280 = scalar_select %p279, %s22, 0
          %s281 = sadd.s32 %s280, %s278
          %s282 = scalar_lea.vmem %s3, %s281
        $region32: #{tpu_custom_call.1} parent=19 // pred_fallthru
          _
        // Predicated region
        $region33: #{tpu_custom_call.1} parent=19 // pred_check
          %p283 = pneg %p164
        $region34: #{tpu_custom_call.1} parent=19 // pred_check_branch
          %285 = sbr.rel (%p283) target = $region36
        $region35: #{tpu_custom_call.1} parent=19 // pred_region
          %s286 = smul.u32 8, %s22
          %p287 = scmp.lt.s32.totalorder %s21, 3
          %s288 = scalar_select %p287, %s21, 3
          %p289 = scmp.lt.s32.totalorder %s286, 7
          %s290 = scalar_select %p289, %s286, 7
          %s291 = smul.addr %s288, 8
          %s292 = sadd.s32 %s290, %s291
          %s293 = smul.addr %s292, 4
          %s294 = scalar_lea.vmem %s4, %s293
          %s295 = smul.u32 8, %s22
        $region36: #{tpu_custom_call.1} parent=19 // pred_fallthru
          _
        // Predicated region
        $region37: #{tpu_custom_call.1} parent=19 // pred_check
          %p296 = pneg %p190
        $region38: #{tpu_custom_call.1} parent=19 // pred_check_branch
          %298 = sbr.rel (%p296) target = $region40
        $region39: #{tpu_custom_call.1} parent=19 // pred_region
          %p299 = scmp.lt.s32.totalorder %s21, 3
          %s300 = scalar_select %p299, %s21, 3
          %s301 = scalar_lea.vmem %s5, %s300
        $region40: #{tpu_custom_call.1} parent=19 // pred_fallthru
          _
      $region20: #{tpu_custom_call.1} parent=5 // pred_fallthru
        _
      %p302 = scmp.le.s32.totalorder 1, %s13
      %p303 = scmp.lt.s32.totalorder %s13, 5
      %p304 = pnand %p302, %p303
      %p305 = pneg %p304
      // Predicated region
      $region41: #{tpu_custom_call.1} parent=5 // pred_check
        _
      $region42: #{tpu_custom_call.1} parent=5 // pred_check_branch
        %307 = sbr.rel (%p304) target = $region44
      $region43: #{tpu_custom_call.1} parent=5 // pred_region
        %s308 = ssub.s32 %s13, 1
        %s309 = smul.u32 2, %s23
        %p310 = scmp.lt.s32.totalorder %s309, 1
        %s311 = scalar_select %p310, %s309, 1
        %s312 = smul.addr %s311, 4
        %s313 = scalar_lea.vmem %s0, %s312
        %p314 = pneg %p58
        %p315 = pneg %p55
        %s316 = smul.u32 2, %s23
        %p317 = scmp.lt.s32.totalorder %s24, 3
        %s318 = scalar_select %p317, %s24, 3
        %p319 = scmp.lt.s32.totalorder %s316, 1
        %s320 = scalar_select %p319, %s316, 1
        %s321 = smul.addr %s318, 2
        %s322 = sadd.s32 %s320, %s321
        %s323 = smul.addr %s322, 8
        %s324 = scalar_lea.vmem %s1, %s323
        %p325 = pneg %p86
        %p326 = pneg %p83
        %p327 = scmp.lt.s32.totalorder %s24, 3
        %s328 = scalar_select %p327, %s24, 3
        %p329 = scmp.lt.s32.totalorder %s25, 0
        %s330 = scalar_select %p329, %s25, 0
        %s331 = smul.addr %s328, 4
        %s332 = sadd.s32 %s330, %s331
        %s333 = smul.addr %s332, 4
        %s334 = scalar_lea.vmem %s2, %s333
        %p335 = pneg %p114
        %p336 = pneg %p111
        %p337 = scmp.lt.s32.totalorder %s24, 3
        %s338 = scalar_select %p337, %s24, 3
        %p339 = scmp.lt.s32.totalorder %s25, 0
        %s340 = scalar_select %p339, %s25, 0
        %s341 = sadd.s32 %s340, %s338
        %s342 = scalar_lea.vmem %s3, %s341
        %p343 = pneg %p142
        %p344 = pneg %p139
        %s345 = smul.u32 8, %s25
        %p346 = scmp.lt.s32.totalorder %s24, 3
        %s347 = scalar_select %p346, %s24, 3
        %p348 = scmp.lt.s32.totalorder %s345, 7
        %s349 = scalar_select %p348, %s345, 7
        %s350 = smul.addr %s347, 8
        %s351 = sadd.s32 %s349, %s350
        %s352 = smul.addr %s351, 4
        %s353 = scalar_lea.vmem %s4, %s352
        %p354 = pneg %p170
        %p355 = pneg %p167
        %p356 = scmp.lt.s32.totalorder %s24, 3
        %s357 = scalar_select %p356, %s24, 3
        %s358 = scalar_lea.vmem %s5, %s357
        %p359 = pneg %p196
        %p360 = pneg %p193
        %p361 = pneg %p222
        %p362 = pneg %p219
        %s363 = smul.u32 2, %s23
        %p364 = scmp.lt.s32.totalorder %s363, 1
        %s365 = scalar_select %p364, %s363, 1
        %s366 = smul.addr %s365, 4
        %s367 = scalar_lea.vmem %s0, %s366
        %s368 = smul.u32 2, %s23
        %s369 = smul.u32 2, %s23
        %p370 = scmp.lt.s32.totalorder %s24, 3
        %s371 = scalar_select %p370, %s24, 3
        %p372 = scmp.lt.s32.totalorder %s369, 1
        %s373 = scalar_select %p372, %s369, 1
        %s374 = smul.addr %s371, 2
        %s375 = sadd.s32 %s373, %s374
        %s376 = smul.addr %s375, 8
        %s377 = scalar_lea.vmem %s1, %s376
        %s378 = smul.u32 2, %s23
        %p379 = scmp.lt.s32.totalorder %s24, 3
        %s380 = scalar_select %p379, %s24, 3
        %p381 = scmp.lt.s32.totalorder %s25, 0
        %s382 = scalar_select %p381, %s25, 0
        %s383 = smul.addr %s380, 4
        %s384 = sadd.s32 %s382, %s383
        %s385 = smul.addr %s384, 4
        %s386 = scalar_lea.vmem %s2, %s385
        %p387 = scmp.lt.s32.totalorder %s24, 3
        %s388 = scalar_select %p387, %s24, 3
        %p389 = scmp.lt.s32.totalorder %s25, 0
        %s390 = scalar_select %p389, %s25, 0
        %s391 = sadd.s32 %s390, %s388
        %s392 = scalar_lea.vmem %s3, %s391
        %s393 = smul.u32 8, %s25
        %p394 = scmp.lt.s32.totalorder %s24, 3
        %s395 = scalar_select %p394, %s24, 3
        %p396 = scmp.lt.s32.totalorder %s393, 7
        %s397 = scalar_select %p396, %s393, 7
        %s398 = smul.addr %s395, 8
        %s399 = sadd.s32 %s397, %s398
        %s400 = smul.addr %s399, 4
        %s401 = scalar_lea.vmem %s4, %s400
        %s402 = smul.u32 8, %s25
        %p403 = scmp.lt.s32.totalorder %s24, 3
        %s404 = scalar_select %p403, %s24, 3
        %s405 = scalar_lea.vmem %s5, %s404
        %s406 = smul.u32 2, %s23
        %p408 = scmp.eq.s32.totalorder %s24, 0
        %p409 = scmp.eq.s32.totalorder %s25, 0
        %p410 = pnand %p408, %p409
        %p411 = pneg %p410
        // Predicated region
        $region45: #{tpu_custom_call.1} parent=43 // pred_check
          _
        $region46: #{tpu_custom_call.1} parent=43 // pred_check_branch
          %413 = sbr.rel (%p410) target = $region48
        $region47: #{tpu_custom_call.1} parent=43 // pred_region
          %vm414 = vcmask 261120
          %415 = vst.msk [vmem:[#allocation2] sm:$0xff] %vm414, 0.0
          %416 = vst.msk [vmem:[#allocation2 + $0x8] sm:$0xff] %vm414, 0.0
        $region48: #{tpu_custom_call.1} parent=43 // pred_fallthru
          _
        %v417 = vlaneseq
        %v418 = vshrl.u32 %v417, 7
        %v419 = vadd.s32 %v418, 8
        %s420 = smul.u32 %s23, 16
        %v421 = vstv %s420
        %v422 = vadd.s32 %v421, %v418
        %v423 = vadd.s32 %v421, %v419
        %vm424 = vcmp.lt.s32.totalorder %v422, 16
        %vm425 = vcmp.lt.s32.totalorder %v423, 16
        %v426 = vld [vmem:[%s377] sm:$0xff]
        %v427 = vld [vmem:[%s377 + $0x8] sm:$0xff]
        %v428 = vsel %vm424, %v426, 0.0
        %v429 = vsel %vm425, %v427, 0.0
        %vm430 = vcmask 7168
        %v431 = vsel %vm430, %v428, -inf
        %v432 = vsel %vm430, %v429, -inf
        %v433 = vmax.f32 %v431, %v432
        %434 = vmax.xlane.f32.xlu0 %v433
        %v435 = vpop.xlane.xlu0 %434
        %v436 = vrot.slane %v435, 4
        %v437 = vmax.f32 %v435, %v436
        %v438 = vrot.slane %v437, 2
        %v439 = vmax.f32 %v437, %v438
        %v440 = vrot.slane %v439, 1
        %v441 = vmax.f32 %v439, %v440
        %s442 = vtos %v441
        %p443 = scmp.gt.f32.partialorder %s442, 0.0
        // Predicated region
        $region49: #{tpu_custom_call.1} parent=43 // pred_check
          %p444 = pneg %p443
        $region50: #{tpu_custom_call.1} parent=43 // pred_check_branch
          %446 = sbr.rel (%p444) target = $region52
        $region51: #{tpu_custom_call.1} parent=43 // pred_region
          %v447 = vld [vmem:[%s367] sm:$0xf]
          %v448 = vld [vmem:[%s367 + $0x4] sm:$0xf]
          %v449 = vld [vmem:[%s386] sm:$0xf]
          %v450 = vld [vmem:[%s386 + $0x4] sm:$0xf]
          %v451 = vld [vmem:[%s386 + $0x8] sm:$0xf]
          %v452 = vld [vmem:[%s386 + $0xc] sm:$0xf]
          %v455 = vunpack.c.l.b16 %v447
          %v456 = vunpack.c.l.b16 %v448
          %v457 = vpack.c.b16 %v456, %v455
          %v462 = vunpack.c.l.b16 %v449
          %v463 = vunpack.c.l.b16 %v450
          %v464 = vunpack.c.l.b16 %v451
          %v465 = vunpack.c.l.b16 %v452
          %v466 = vpack.c.b16 %v463, %v462
          %v467 = vpack.c.b16 %v465, %v464
          %vm470 = vcmask 261120
          %v472 = vsel %vm470, %v457, 0
          %474 = vmatpush.bf16.msra.mxu0 0
          %475 = vmatpush.bf16.msra.mxu0 0
          %476 = vmatpush.bf16.msra.mxu0 0
          %477 = vmatpush.bf16.msra.mxu0 0
          %478 = vmatpush.bf16.msra.mxu0 0
          %479 = vmatpush.bf16.msra.mxu0 0
          %480 = vmatpush.bf16.msra.mxu0 %v467
          %481 = vmatpush.bf16.msra.mxu0 %v466
          %482 = vmatmul.bf16.gmra.mxu0 %v472
          %v483 = vpop.f32.mrf.mxu0
          %v484 = vadd.f32 0.0, %v483
          %v485 = vpop.f32.mrf.mxu0
          %v486 = vadd.f32 0.0, %v485
          %487 = vdwg.mxu0
          %v488 = vld [vmem:[%s392] sm:$0x1]
          %v489 = vxor.u32 %v484, 2147483648
          %v490 = vxor.u32 %v486, 2147483648
          %v491 = vmul.f32 %v489, 1.442695
          %v492 = vpow.pop %v491
          %v493 = vmul.f32 %v490, 1.442695
          %v494 = vpow.pop %v493
          %v495 = vadd.f32 %v492, 1.0
          %v496 = vadd.f32 %v494, 1.0
          %v497 = vrcp.pop %v495
          %v498 = vmul.f32 %v495, %v497
          %v499 = vsub.f32 1.0, %v498
          %v500 = vmul.f32 %v497, %v499
          %v501 = vadd.f32 %v497, %v500
          %vm502 = vweird.f32 %v495
          %vm503 = vweird.f32 %v497
          %vm504 = vmor %vm502, %vm503
          %v505 = vsel %vm504, %v497, %v501
          %v506 = vand.u32 2147483647, %v495
          %vm507 = vcmp.eq.f32.partialorder %v506, 8.507059e+37
          %v508 = vand.u32 %v495, 2147483648
          %v509 = vor.u32 1.1754944e-38, %v508
          %v510 = vsel %vm507, %v509, %v505
          %v511 = vmul.f32 1.0, %v510
          %v512 = vrcp.pop %v496
          %v513 = vmul.f32 %v496, %v512
          %v514 = vsub.f32 1.0, %v513
          %v515 = vmul.f32 %v512, %v514
          %v516 = vadd.f32 %v512, %v515
          %vm517 = vweird.f32 %v496
          %vm518 = vweird.f32 %v512
          %vm519 = vmor %vm517, %vm518
          %v520 = vsel %vm519, %v512, %v516
          %v521 = vand.u32 2147483647, %v496
          %vm522 = vcmp.eq.f32.partialorder %v521, 8.507059e+37
          %v523 = vand.u32 %v496, 2147483648
          %v524 = vor.u32 1.1754944e-38, %v523
          %v525 = vsel %vm522, %v524, %v520
          %v526 = vmul.f32 1.0, %v525
          %v527 = vmul.f32 %v484, %v511
          %v528 = vmul.f32 %v486, %v526
          %531 = vrot.lane.b32.xlu0 %v484, 64
          %v532 = vpop.permute.xlu0 %531
          %533 = vrot.lane.b32.xlu0 %v486, 64
          %v534 = vpop.permute.xlu0 %533
          %v537 = vmul.f32 %v527, %v532
          %v538 = vmul.f32 %v528, %v534
          %v540 = vperm.slane %v488, 0
          %v542 = vadd.f32 %v537, %v540
          %v543 = vadd.f32 %v538, %v540
          %v544 = vpack.c.bf16 %v543, %v542
          %v545 = vld [vmem:[%s401] sm:$0xf]
          %v546 = vld [vmem:[%s401 + $0x4] sm:$0xf]
          %v547 = vld [vmem:[%s401 + $0x8] sm:$0xf]
          %v548 = vld [vmem:[%s401 + $0xc] sm:$0xf]
          %v549 = vld [vmem:[%s401 + $0x10] sm:$0xf]
          %v550 = vld [vmem:[%s401 + $0x14] sm:$0xf]
          %v551 = vld [vmem:[%s401 + $0x18] sm:$0xf]
          %v552 = vld [vmem:[%s401 + $0x1c] sm:$0xf]
          %v561 = vunpack.c.l.b16 %v545
          %v562 = vunpack.c.l.b16 %v546
          %v563 = vunpack.c.l.b16 %v547
          %v564 = vunpack.c.l.b16 %v548
          %v565 = vunpack.c.l.b16 %v549
          %v566 = vunpack.c.l.b16 %v550
          %v567 = vunpack.c.l.b16 %v551
          %v568 = vunpack.c.l.b16 %v552
          %v569 = vpack.c.b16 %v562, %v561
          %v570 = vpack.c.b16 %v564, %v563
          %v571 = vpack.c.b16 %v566, %v565
          %v572 = vpack.c.b16 %v568, %v567
          %vm577 = vcmask 523264
          %v579 = vsel %vm577, %v544, 0
          %581 = vmatpush.bf16.msra.mxu0 0
          %582 = vmatpush.bf16.msra.mxu0 0
          %583 = vmatpush.bf16.msra.mxu0 0
          %584 = vmatpush.bf16.msra.mxu0 0
          %585 = vmatpush.bf16.msra.mxu0 %v572
          %586 = vmatpush.bf16.msra.mxu0 %v571
          %587 = vmatpush.bf16.msra.mxu0 %v570
          %588 = vmatpush.bf16.msra.mxu0 %v569
          %589 = vmatmul.bf16.gmra.mxu0 %v579
          %v590 = vpop.f32.mrf.mxu0
          %v591 = vadd.f32 0.0, %v590
          %v592 = vpop.f32.mrf.mxu0
          %v593 = vadd.f32 0.0, %v592
          %594 = vdwg.mxu0
          // Predicated region
          $region53: #{tpu_custom_call.1} parent=51 // pred_check
            %p595 = pneg %p409
          $region54: #{tpu_custom_call.1} parent=51 // pred_check_branch
            %597 = sbr.rel (%p595) target = $region56
          $region55: #{tpu_custom_call.1} parent=51 // pred_region
            %v598 = vld [vmem:[#allocation2] sm:$0xff]
            %v599 = vld [vmem:[#allocation2 + $0x8] sm:$0xff]
            %v600 = vld [vmem:[%s405] sm:$0x1]
            %602 = vset.pattern.permute.xlu0 0
            %603 = vperm.xlu0 %602, %v428
            %v604 = vpop.permute.xlu0 %603
            %607 = vset.pattern.permute.xlu0 0
            %608 = vperm.xlu0 %607, %v429
            %v609 = vpop.permute.xlu0 %608
            %v612 = vperm.slane %v600, 0
            %v614 = vmul.f32 %v604, %v612
            %v615 = vmul.f32 %v609, %v612
            %v616 = vadd.f32 %v598, %v614
            %v617 = vadd.f32 %v599, %v615
            %618 = vst.msk [vmem:[#allocation2] sm:$0xff] %vm470, %v616
            %619 = vst.msk [vmem:[#allocation2 + $0x8] sm:$0xff] %vm470, %v617
          $region56: #{tpu_custom_call.1} parent=51 // pred_fallthru
            _
          %v620 = vld [vmem:[#allocation2] sm:$0xff]
          %v621 = vld [vmem:[#allocation2 + $0x8] sm:$0xff]
          %623 = vset.pattern.permute.xlu0 0
          %624 = vperm.xlu0 %623, %v428
          %v625 = vpop.permute.xlu0 %624
          %628 = vset.pattern.permute.xlu0 0
          %629 = vperm.xlu0 %628, %v429
          %v630 = vpop.permute.xlu0 %629
          %v632 = vmul.f32 %v625, %v591
          %v633 = vmul.f32 %v630, %v593
          %v634 = vadd.f32 %v620, %v632
          %v635 = vadd.f32 %v621, %v633
          %636 = vst.msk [vmem:[#allocation2] sm:$0xff] %vm470, %v634
          %637 = vst.msk [vmem:[#allocation2 + $0x8] sm:$0xff] %vm470, %v635
        $region52: #{tpu_custom_call.1} parent=43 // pred_fallthru
          _
        %p638 = scmp.eq.s32.totalorder %s24, 3
        %p639 = pnand %p638, %p409
        %p640 = pneg %p639
        // Predicated region
        $region57: #{tpu_custom_call.1} parent=43 // pred_check
          _
        $region58: #{tpu_custom_call.1} parent=43 // pred_check_branch
          %642 = sbr.rel (%p639) target = $region60
        $region59: #{tpu_custom_call.1} parent=43 // pred_region
          %v643 = vld [vmem:[#allocation2] sm:$0xff]
          %v644 = vld [vmem:[#allocation2 + $0x8] sm:$0xff]
          %vm645 = vcmask 261120
          %646 = vst.msk [vmem:[#allocation3] sm:$0xff] %vm645, %v643
          %647 = vst.msk [vmem:[#allocation3 + $0x8] sm:$0xff] %vm645, %v644
        $region60: #{tpu_custom_call.1} parent=43 // pred_fallthru
          _
        // Predicated region
        $region61: #{tpu_custom_call.1} parent=43 // pred_check
          %p648 = pneg %p219
        $region62: #{tpu_custom_call.1} parent=43 // pred_check_branch
          %650 = sbr.rel (%p648) target = $region64
        $region63: #{tpu_custom_call.1} parent=43 // pred_region
          %s651 = smul.u32 2, %s23
          %653 = vsyncadd [#allocation4], 0
          %s654 = smul.addr %s651, 8
          %s655 = scalar_lea.hbm %s6, %s654
          %s656 = sshll.u32 [#allocation3], 4
          %s657 = int_to_ptr.vmem [resolvable:$true] %s656
          %s658 = sshll.u32 %s655, 4
          %s659 = int_to_ptr.hbm [resolvable:$true] %s658
          %664 = dma.vmem_to_hbm [thread:$0]  %s657, 256, %s659, [#allocation4], 128, 128, 8
        $region64: #{tpu_custom_call.1} parent=43 // pred_fallthru
          _
        // Predicated region
        $region65: #{tpu_custom_call.1} parent=43 // pred_check
          %p665 = pneg %p219
        $region66: #{tpu_custom_call.1} parent=43 // pred_check_branch
          %667 = sbr.rel (%p665) target = $region68
        $region67: #{tpu_custom_call.1} parent=43 // pred_region
          %669 = dma.done [#allocation4], 256
        $region68: #{tpu_custom_call.1} parent=43 // pred_fallthru
          _
      $region44: #{tpu_custom_call.1} parent=5 // pred_fallthru
        _
      %p670 = scmp.le.s32.totalorder 2, %s13
      // Predicated region
      $region69: #{tpu_custom_call.1} parent=5 // pred_check
        %p671 = pneg %p670
      $region70: #{tpu_custom_call.1} parent=5 // pred_check_branch
        %673 = sbr.rel (%p671) target = $region72
      $region71: #{tpu_custom_call.1} parent=5 // pred_region
        %s674 = ssub.s32 %s13, 2
      $region72: #{tpu_custom_call.1} parent=5 // pred_fallthru
        _
    $region6: #{tpu_custom_call.1} parent=1 // loop_footer
      %s17 = sadd.s32 1, %s13
    $region7: #{tpu_custom_call.1} parent=1 // loop_footer_branch
      %12 = sbr.rel target = $region3
    $region8: #{tpu_custom_call.1} parent=1 // loop_exit
      _
    %675 = vsyncpa [#allocation4], 1
    %s676 = scalar_lea.sflag [#allocation4], 1
    %677 = vsyncpa %s676, 1

</llo_original>
